<compile_context>
chip_gen: v5e
topology: v5e:2x2
jax: 0.10.0
libtpu: 0.0.40
codegen_flags: <defaults>
</compile_context>

<pallas_src>
import functools

import jax
import jax.numpy as jnp
from jax.experimental import pallas as pl
from jax.experimental.pallas import tpu as pltpu


def _round_up(x, m):
    return ((x + m - 1) // m) * m


def _variance_norm_kernel(x_ref, alpha_ref, o_ref, *, hw):
    # x_ref:     (block_rows, hw_pad)  one row per (n, c); padded lanes are 0
    #            and contribute nothing to the sums, so using the true `hw`
    #            in the formulas below is exact.
    # alpha_ref: (block_rows, 1) per-row channel scale (f32).
    x = x_ref[...]
    xf = x.astype(jnp.float32)                     # no-op for f32 inputs
    s1 = jnp.sum(xf, axis=1, keepdims=True)
    s2 = jnp.sum(xf * xf, axis=1, keepdims=True)
    # torch.var default is unbiased: denominator (hw - 1).
    # (hw == 1 divides by 0.0f -> nan, matching torch.)
    var = (s2 - s1 * s1 * jnp.float32(1.0 / hw)) / jnp.float32(hw - 1)
    inv = jax.lax.rsqrt(var + jnp.float32(1e-5))
    # Fold alpha into the per-row scale first: one tiny (rows,1) mul, then a
    # single full-tile multiply in the input dtype.
    scale = (alpha_ref[...] * inv).astype(x.dtype)
    o_ref[...] = x * scale


def variance_norm_1d(x, alpha, *, max_block_rows=1024,
                     vmem_tile_budget_bytes=32 * 1024 * 1024):
    """x: (N, C, H, W), alpha: (C,). Returns (N, C, H, W)."""
    N, C, H, W = x.shape
    rows = N * C
    hw = H * W
    itemsize = jnp.dtype(x.dtype).itemsize

    # Lane-dense reduction axis: pad H*W to a multiple of 128 with zeros.
    hw_pad = _round_up(hw, 128)

    # Row tile: multiple of 8 (sublane rule), sized so the double-buffered
    # input + output tiles (4 buffers of block_rows*hw_pad*itemsize) stay
    # inside a conservative VMEM budget (safe on v7x's 64 MiB as well as
    # v5e/v6e), capped at 1024 rows (measured mem-bound knee on v6e).
    per_buf_budget = max(1, vmem_tile_budget_bytes // 4)
    block_rows = per_buf_budget // (hw_pad * itemsize)
    block_rows = max(8, min(block_rows, max_block_rows))
    block_rows = (block_rows // 8) * 8
    rows_pad8 = _round_up(rows, 8)
    block_rows = min(block_rows, rows_pad8)
    rows_pad = _round_up(rows, block_rows)
    grid = (rows_pad // block_rows,)

    x2d = x.reshape(rows, hw)
    if hw_pad != hw or rows_pad != rows:
        x2d = jnp.pad(x2d, ((0, rows_pad - rows), (0, hw_pad - hw)))

    # Per-row channel scale: row r corresponds to channel r % C; pad rows
    # with 1.0 (padded rows are discarded after the call).
    alpha_rows = jnp.tile(alpha.astype(jnp.float32), N).reshape(rows, 1)
    if rows_pad != rows:
        alpha_rows = jnp.pad(alpha_rows, ((0, rows_pad - rows), (0, 0)),
                             constant_values=1.0)

    kernel = functools.partial(_variance_norm_kernel, hw=hw)

    out2d = pl.pallas_call(
        kernel,
        out_shape=jax.ShapeDtypeStruct((rows_pad, hw_pad), x.dtype),
        grid=grid,
        in_specs=[
            pl.BlockSpec((block_rows, hw_pad), lambda i: (i, 0)),
            pl.BlockSpec((block_rows, 1), lambda i: (i, 0)),
        ],
        out_specs=pl.BlockSpec((block_rows, hw_pad), lambda i: (i, 0)),
        compiler_params=pltpu.CompilerParams(
            dimension_semantics=("parallel",),
            vmem_limit_bytes=48 * 1024 * 1024,
        ),
    )(x2d, alpha_rows)

    out2d = out2d[:rows, :hw]
    return out2d.reshape(N, C, H, W)


def _reference(x, alpha):
    # pure-JAX reference matching torch semantics (unbiased variance, two-pass)
    mean = jnp.mean(x, axis=(2, 3), keepdims=True)
    hw = x.shape[2] * x.shape[3]
    var = jnp.sum((x - mean) ** 2, axis=(2, 3), keepdims=True) / (hw - 1)
    h = x / jnp.sqrt(var + 1e-5)
    return alpha.reshape(1, -1, 1, 1) * h


if __name__ == "__main__":
    key = jax.random.PRNGKey(0)
    k_x, k_a = jax.random.split(key)

    N, C, H, W = 2, 4, 16, 16
    x = jax.random.normal(k_x, (N, C, H, W), dtype=jnp.float32)
    # alpha ~ N(1, 0.02) as in the module's __init__ (deterministic via PRNGKey)
    alpha = 1.0 + 0.02 * jax.random.normal(k_a, (C,), dtype=jnp.float32)

    out = variance_norm_1d(x, alpha)
    out = jax.block_until_ready(out)

    ref = _reference(x, alpha)
    assert out.shape == (N, C, H, W)
    assert jnp.allclose(out, ref, atol=1e-4, rtol=1e-4), "mismatch vs reference"

    print("KERNEL_OK")
</pallas_src>

<mosaic_0001>
module attributes {stable_mosaic.version = 11 : i64} {
  func.func @_variance_norm_kernel(%arg0: i32, %arg1: memref<8x256xf32, #tpu.memory_space<vmem>>, %arg2: memref<8x1xf32, #tpu.memory_space<vmem>>, %arg3: memref<8x256xf32, #tpu.memory_space<vmem>>) attributes {dimension_semantics = [#tpu.dimension_semantics<parallel>], iteration_bounds = array<i64: 1>, scalar_prefetch = 0 : i64, scratch_operands = 0 : i64, tpu.core_type = #tpu.core_type<tc>, window_params = [{transform_indices = @transform_0, window_bounds = array<i64: 8, 256>}, {transform_indices = @transform_1, window_bounds = array<i64: 8, 1>}, {transform_indices = @transform_2, window_bounds = array<i64: 8, 256>}]} {
    %c0 = arith.constant 0 : index
    %c0_0 = arith.constant 0 : index
    %0 = vector.load %arg1[%c0, %c0_0] : memref<8x256xf32, #tpu.memory_space<vmem>>, vector<8x256xf32>
    %cst = arith.constant dense<0.000000e+00> : vector<8xf32>
    %1 = vector.multi_reduction <add>, %0, %cst [1] : vector<8x256xf32> to vector<8xf32>
    %2 = vector.shape_cast %1 : vector<8xf32> to vector<8x1xf32>
    %3 = arith.mulf %0, %0 : vector<8x256xf32>
    %cst_1 = arith.constant dense<0.000000e+00> : vector<8xf32>
    %4 = vector.multi_reduction <add>, %3, %cst_1 [1] : vector<8x256xf32> to vector<8xf32>
    %5 = vector.shape_cast %4 : vector<8xf32> to vector<8x1xf32>
    %6 = arith.mulf %2, %2 : vector<8x1xf32>
    %cst_2 = arith.constant 3.906250e-03 : f32
    %7 = vector.broadcast %cst_2 : f32 to vector<8x1xf32>
    %8 = arith.mulf %6, %7 : vector<8x1xf32>
    %9 = arith.subf %5, %8 : vector<8x1xf32>
    %cst_3 = arith.constant 2.550000e+02 : f32
    %10 = vector.broadcast %cst_3 : f32 to vector<8x1xf32>
    %11 = arith.divf %9, %10 : vector<8x1xf32>
    %cst_4 = arith.constant 9.99999974E-6 : f32
    %12 = vector.broadcast %cst_4 : f32 to vector<8x1xf32>
    %13 = arith.addf %11, %12 : vector<8x1xf32>
    %14 = math.rsqrt %13 : vector<8x1xf32>
    %c0_5 = arith.constant 0 : index
    %c0_6 = arith.constant 0 : index
    %15 = vector.load %arg2[%c0_5, %c0_6] : memref<8x1xf32, #tpu.memory_space<vmem>>, vector<8x1xf32>
    %16 = arith.mulf %15, %14 : vector<8x1xf32>
    %17 = vector.broadcast %16 : vector<8x1xf32> to vector<8x256xf32>
    %18 = arith.mulf %0, %17 : vector<8x256xf32>
    %c0_7 = arith.constant 0 : index
    %c0_8 = arith.constant 0 : index
    %19 = vector.load %arg3[%c0_7, %c0_8] : memref<8x256xf32, #tpu.memory_space<vmem>>, vector<8x256xf32>
    tpu.vector_store %arg3[%c0_7, %c0_8], %18 {strides = array<i32>} : memref<8x256xf32, #tpu.memory_space<vmem>>, vector<8x256xf32>,
    return
  }
  func.func @transform_0(%arg0: i32) -> (i32, i32) {
    %c0_i32 = arith.constant 0 : i32
    %c0_i32_0 = arith.constant 0 : i32
    return %arg0, %c0_i32 : i32, i32
  }
  func.func @transform_1(%arg0: i32) -> (i32, i32) {
    %c0_i32 = arith.constant 0 : i32
    %c0_i32_0 = arith.constant 0 : i32
    return %arg0, %c0_i32 : i32, i32
  }
  func.func @transform_2(%arg0: i32) -> (i32, i32) {
    %c0_i32 = arith.constant 0 : i32
    %c0_i32_0 = arith.constant 0 : i32
    return %arg0, %c0_i32 : i32, i32
  }
}

</mosaic_0001>

<llo_original>
// kernel: tpu_custom_call.1
$region0: #{tpu_custom_call.1}
  #allocation0 [shape = 'u32[]', space=smem, size = 0x4, offset = 0x4, fixed_abs, tag = 'smem constant byte address 0x4 - core index']
  #allocation1 [shape = 'u32[72,128]{1,0:T(1,128)}', space=vmem, size = 0x9000, scoped, tag = 'internal scratch']
  %s0 = inlined_call_operand.hbm [shape: f32[8,256], index: 0, kind: input, shape index: {}]
  %s1 = inlined_call_operand.vmem [shape: f32[8,1], index: 1, kind: input, shape index: {}]
  %s2 = inlined_call_operand.hbm [shape: f32[8,256], index: 2, kind: output, shape index: {}]
  %s3 = sld [smem:[#allocation0]]
  $region22: #{tpu_custom_call.1} parent=0
    _
  %s5 = ssub.s32 1, %s3
  %s6 = scalar_select 0, %s5, %s3
  $region1: #{tpu_custom_call.1} parent=0
    #allocation2 [shape = 'u8[8192]{0}', space=vmem, size = 0x2000, scoped, tag = 'input window, operand 0, single buffered']
    #allocation3 [shape = 's32[1]{0}', space=sflag, size = 0x4, scoped, tag = 'scoped memory for tpu_custom_call.1']
    #allocation4 [shape = 's32[1]{0}', space=sflag, size = 0x4, scoped, tag = 'scoped memory for tpu_custom_call.1']
    #allocation5 [shape = 'u8[8192]{0}', space=vmem, size = 0x2000, scoped, tag = 'output window, operand 0, single buffered']
    %7 = vsyncpa [#allocation3], 0
    %8 = vsyncpa [#allocation4], 0
    // Predicated region
    $region2: #{tpu_custom_call.1} parent=1 // pred_check
      _
    $region3: #{tpu_custom_call.1} parent=1 // pred_check_branch
      %10 = sbr.rel (0) target = $region5
    $region4: #{tpu_custom_call.1} parent=1 // pred_region
      %12 = vsyncadd [#allocation3], 0
      %s14 = sshll.u32 %s0, 4
      %s15 = int_to_ptr.hbm [resolvable:$true] %s14
      %s16 = sshll.u32 [#allocation2], 4
      %s17 = int_to_ptr.vmem [resolvable:$true] %s16
      %19 = dma.hbm_to_vmem [thread:$0]  %s15, 256, %s17, [#allocation3]
    $region5: #{tpu_custom_call.1} parent=1 // pred_fallthru
      _
    // Predicated region
    $region6: #{tpu_custom_call.1} parent=1 // pred_check
      _
    $region7: #{tpu_custom_call.1} parent=1 // pred_check_branch
      %21 = sbr.rel (0) target = $region9
    $region8: #{tpu_custom_call.1} parent=1 // pred_region
      _
    $region9: #{tpu_custom_call.1} parent=1 // pred_fallthru
      _
    // Predicated region
    $region10: #{tpu_custom_call.1} parent=1 // pred_check
      _
    $region11: #{tpu_custom_call.1} parent=1 // pred_check_branch
      %23 = sbr.rel (0) target = $region13
    $region12: #{tpu_custom_call.1} parent=1 // pred_region
      %25 = dma.done [#allocation3], 256
    $region13: #{tpu_custom_call.1} parent=1 // pred_fallthru
      _
    %v26 = vld [vmem:[#allocation2] sm:$0xff]
    %v27 = vld [vmem:[#allocation2 + $0x8] sm:$0xff]
    %v28 = vadd.f32 %v26, %v27
    %29 = vadd.xlane.f32.xlu0 %v28
    %v30 = vpop.xlane.xlu0 %29
    %v31 = vmul.f32 %v26, %v26
    %v32 = vmul.f32 %v27, %v27
    %v33 = vadd.f32 %v31, %v32
    %34 = vadd.xlane.f32.xlu0 %v33
    %v35 = vpop.xlane.xlu0 %34
    %v36 = vmul.f32 %v30, %v30
    %v37 = vmul.f32 %v36, 0.00390625
    %v38 = vsub.f32 %v35, %v37
    %v39 = vrcp.pop 255.0
    %v40 = vmul.f32 255.0, %v39
    %v41 = vsub.f32 1.0, %v40
    %v42 = vmul.f32 %v39, %v41
    %v43 = vadd.f32 %v39, %v42
    %vm44 = vweird.f32 %v39
    %v45 = vsel %vm44, %v39, %v43
    %v46 = vmul.f32 %v38, %v45
    %v47 = vadd.f32 %v46, 1e-05
    %v48 = vrsqrt.pop %v47
    %v49 = vmul.f32 %v48, %v47
    %v50 = vmul.f32 %v49, %v48
    %v51 = vmul.f32 0.5, %v50
    %v52 = vsub.f32 1.5, %v51
    %v53 = vmul.f32 %v48, %v52
    %vm54 = vweird.f32 %v47
    %vm55 = vweird.f32 %v48
    %vm56 = vmor %vm54, %vm55
    %v57 = vsel %vm56, %v48, %v53
    %v58 = vld [vmem:[%s1] sm:$0xff]
    %v59 = vmul.f32 %v58, %v57
    %61 = vset.pattern.permute.xlu0 0
    %62 = vperm.xlu0 %61, %v59
    %v63 = vpop.permute.xlu0 %62
    %v65 = vmul.f32 %v26, %v63
    %v66 = vmul.f32 %v27, %v63
    %67 = vst [vmem:[#allocation5] sm:$0xff] %v65
    %68 = vst [vmem:[#allocation5 + $0x8] sm:$0xff] %v66
    // Predicated region
    $region14: #{tpu_custom_call.1} parent=1 // pred_check
      _
    $region15: #{tpu_custom_call.1} parent=1 // pred_check_branch
      %70 = sbr.rel (0) target = $region17
    $region16: #{tpu_custom_call.1} parent=1 // pred_region
      %72 = vsyncadd [#allocation4], 0
      %s74 = sshll.u32 [#allocation5], 4
      %s75 = int_to_ptr.vmem [resolvable:$true] %s74
      %s76 = sshll.u32 %s2, 4
      %s77 = int_to_ptr.hbm [resolvable:$true] %s76
      %79 = dma.vmem_to_hbm [thread:$0]  %s75, 256, %s77, [#allocation4]
    $region17: #{tpu_custom_call.1} parent=1 // pred_fallthru
      _
    // Predicated region
    $region18: #{tpu_custom_call.1} parent=1 // pred_check
      _
    $region19: #{tpu_custom_call.1} parent=1 // pred_check_branch
      %81 = sbr.rel (0) target = $region21
    $region20: #{tpu_custom_call.1} parent=1 // pred_region
      %83 = dma.done [#allocation4], 256
    $region21: #{tpu_custom_call.1} parent=1 // pred_fallthru
      _
    %84 = vsyncpa [#allocation3], 1
    %85 = vsyncpa [#allocation4], 1

</llo_original>
